<compile_context>
chip_gen: v7x
topology: tpu7x:2x2x1
jax: 0.10.0
libtpu: 0.0.40
codegen_flags: <defaults>
</compile_context>

<pallas_src>
import numpy as np
import jax
import jax.numpy as jnp
from jax import lax
from jax.experimental import pallas as pl
from jax.experimental.pallas import tpu as pltpu

BN_EPS = 1e-5  # nn.BatchNorm2d default


def _round_up(v, m):
    return ((v + m - 1) // m) * m


def _linear_weights(s_in, s_out):
    """PyTorch bilinear (align_corners=False) 1-D interpolation matrix (s_out, s_in)."""
    A = np.zeros((s_out, s_in), np.float32)
    if s_in == 1:
        A[:, 0] = 1.0
        return A
    scale = s_in / s_out
    for o in range(s_out):
        src = max((o + 0.5) * scale - 0.5, 0.0)
        i0 = min(int(np.floor(src)), s_in - 1)
        t = src - i0
        i1 = min(i0 + 1, s_in - 1)
        A[o, i0] += 1.0 - t
        A[o, i1] += t
    return A


def _kernel(xs_ref, w_ref, s_ref, ah_ref, bw_ref, o_ref):
    # xs_ref: (1, H_cp, K2p)      row-im2col'd input frame
    # w_ref : (K2p, NL1)          banded conv weights (BN scale folded in)
    # s_ref : (1, NL1)            folded BN shift, broadcast over (c, x) lanes
    # ah_ref: (H_up_blk, H_cp)    height-interpolation row block
    # bw_ref: (NL1, NL2)          block-diagonal width-interpolation matrix
    # o_ref : (1, H_up_blk, NL2)
    # 1) conv (+ BN scale) as one MXU matmul, f32 accumulate
    a = jnp.dot(xs_ref[0], w_ref[...], preferred_element_type=jnp.float32)
    # 2) folded BN shift + ReLU (padded lanes / rows stay harmless: the
    #    interpolation matrices have zero weights there)
    a = jnp.maximum(a + s_ref[...], 0.0)
    # 3) separable bilinear upsample: height matmul then width matmul
    t = jnp.dot(ah_ref[...], a, preferred_element_type=jnp.float32)
    o_ref[0] = jnp.dot(t, bw_ref[...], preferred_element_type=jnp.float32)


def xzh_up_pallas(x_nchw, params, eps=BN_EPS):
    N, C_in, H, W = x_nchw.shape
    C_out = C_in // 4
    H_c, W_c = H - 2, W - 2
    if H == 23:
        H_up, W_up = 45, 80
    else:
        H_up, W_up = 2 * H, 2 * W

    NG = 2                                    # upsample row blocks (v7x: 2 TCs)
    K2 = 3 * C_in * W                         # conv contraction (ky, ci, x')
    K2p = _round_up(K2, 128)                  # lane-aligned contraction
    H_cp = _round_up(H_c, 8)                  # conv rows (sublane aligned)
    NL1 = _round_up(C_out * W_c, 128)         # (c, x) lanes after conv
    NL2 = _round_up(C_out * W_up, 128)        # (c, j) lanes of the output
    H_up_p = _round_up(H_up, 8 * NG)
    H_up_blk = H_up_p // NG

    # ---- row im2col: Xs[n, y, ky*C_in*W + ci*W + x'] = x[n, ci, y+ky, x'] ----
    rows = jnp.stack([x_nchw[:, :, ky:ky + H_c, :] for ky in range(3)], axis=1)
    Xs = jnp.transpose(rows, (0, 3, 1, 2, 4)).reshape(N, H_c, K2)
    Xs = jnp.pad(Xs, ((0, 0), (0, H_cp - H_c), (0, K2p - K2))).astype(jnp.float32)

    # ---- fold BN (running stats) into conv weight + one shift ----
    scale = params["gamma"] / jnp.sqrt(params["var"] + eps)           # (C_out,)
    shift = params["beta"] - params["mean"] * scale                   # (C_out,)
    w_f = params["w"] * scale[:, None, None, None]                    # (C_out, C_in, 3, 3)

    # ---- banded conv matrix: Wbig[(ky,ci,x'), (c,x)] = w_f[c,ci,ky,x'-x] ----
    S = np.zeros((3, W, W_c), np.float32)                             # S[kx, x', x] = (x' == x + kx)
    for kx in range(3):
        S[kx, kx:kx + W_c, :] = np.eye(W_c, dtype=np.float32)
    Wbig = jnp.einsum('oiyk,kpq->yipoq', w_f, jnp.asarray(S)).reshape(K2, C_out * W_c)
    Wbig = jnp.pad(Wbig, ((0, K2p - K2), (0, NL1 - C_out * W_c))).astype(jnp.float32)

    shift_l = jnp.repeat(shift, W_c)                                  # lane layout c*W_c + x
    shift_l = jnp.pad(shift_l, (0, NL1 - C_out * W_c)).reshape(1, NL1).astype(jnp.float32)

    # ---- separable bilinear matrices (align_corners=False, half-pixel rule) ----
    A_h = np.zeros((H_up_p, H_cp), np.float32)
    A_h[:H_up, :H_c] = _linear_weights(H_c, H_up)                     # (H_up, H_c)
    A_h = jnp.asarray(A_h)

    A_w = _linear_weights(W_c, W_up)                                  # (W_up, W_c)
    Bw = np.zeros((NL1, NL2), np.float32)                             # block-diag over channels
    for c in range(C_out):
        Bw[c * W_c:(c + 1) * W_c, c * W_up:(c + 1) * W_up] = A_w.T
    Bw = jnp.asarray(Bw)

    out_flat = pl.pallas_call(
        _kernel,
        out_shape=jax.ShapeDtypeStruct((N, H_up_p, NL2), jnp.float32),
        grid=(N, NG),
        in_specs=[
            pl.BlockSpec((1, H_cp, K2p), lambda n, g: (n, 0, 0)),
            pl.BlockSpec((K2p, NL1), lambda n, g: (0, 0)),
            pl.BlockSpec((1, NL1), lambda n, g: (0, 0)),
            pl.BlockSpec((H_up_blk, H_cp), lambda n, g: (g, 0)),
            pl.BlockSpec((NL1, NL2), lambda n, g: (0, 0)),
        ],
        out_specs=pl.BlockSpec((1, H_up_blk, NL2), lambda n, g: (n, g, 0)),
        compiler_params=pltpu.CompilerParams(
            dimension_semantics=("parallel", "parallel")),
    )(Xs, Wbig, shift_l, A_h, Bw)

    out = out_flat[:, :H_up, :C_out * W_up].reshape(N, H_up, C_out, W_up)
    return jnp.transpose(out, (0, 2, 1, 3))


# ---------------- pure-JAX reference (for verification) ----------------

def _resize_axis_ref(x, axis, s_out):
    s_in = x.shape[axis]
    scale = s_in / s_out
    o = jnp.arange(s_out, dtype=jnp.float32)
    src = jnp.maximum((o + 0.5) * scale - 0.5, 0.0)
    i0 = jnp.clip(jnp.floor(src).astype(jnp.int32), 0, s_in - 1)
    t = src - i0.astype(jnp.float32)
    i1 = jnp.clip(i0 + 1, 0, s_in - 1)
    x0 = jnp.take(x, i0, axis=axis)
    x1 = jnp.take(x, i1, axis=axis)
    sh = [1] * x.ndim
    sh[axis] = s_out
    t = t.reshape(sh)
    return x0 * (1.0 - t) + x1 * t


def xzh_up_ref(x, params, eps=BN_EPS):
    _, _, H, W = x.shape
    if H == 23:
        H_up, W_up = 45, 80
    else:
        H_up, W_up = 2 * H, 2 * W
    scale = params["gamma"] / jnp.sqrt(params["var"] + eps)
    shift = params["beta"] - params["mean"] * scale
    w_f = params["w"] * scale[:, None, None, None]
    conv = lax.conv_general_dilated(
        x, w_f, window_strides=(1, 1), padding="VALID",
        dimension_numbers=("NCHW", "OIHW", "NCHW"),
        precision=lax.Precision.HIGHEST)
    a = jnp.maximum(conv + shift[None, :, None, None], 0.0)
    a = _resize_axis_ref(a, 2, H_up)
    a = _resize_axis_ref(a, 3, W_up)
    return a


def init_params(key, c_in):
    c_out = c_in // 4
    ks = jax.random.split(key, 5)
    return {
        "w": 0.2 * jax.random.normal(ks[0], (c_out, c_in, 3, 3), jnp.float32),
        "gamma": 1.0 + 0.1 * jax.random.normal(ks[1], (c_out,), jnp.float32),
        "beta": 0.1 * jax.random.normal(ks[2], (c_out,), jnp.float32),
        "mean": 0.1 * jax.random.normal(ks[3], (c_out,), jnp.float32),
        "var": jax.random.uniform(ks[4], (c_out,), jnp.float32, 0.5, 1.5),
    }


if __name__ == "__main__":
    key = jax.random.PRNGKey(0)
    k1, k2, kp = jax.random.split(key, 3)

    C_in = 16                      # -> C_out = in_channels // 4 = 4
    params = init_params(kp, C_in)

    # generic branch: (H, W) -> (2H, 2W)
    x1 = jax.random.normal(k1, (2, C_in, 16, 16), jnp.float32)
    out1 = jax.block_until_ready(xzh_up_pallas(x1, params))
    ref1 = xzh_up_ref(x1, params)
    assert out1.shape == (2, C_in // 4, 32, 32), out1.shape
    err1 = jnp.max(jnp.abs(out1 - ref1))
    assert jnp.allclose(out1, ref1, rtol=2e-2, atol=2e-2), f"max abs err {err1}"

    # h == 23 branch: fixed (45, 80) target size
    x2 = jax.random.normal(k2, (1, C_in, 23, 40), jnp.float32)
    out2 = jax.block_until_ready(xzh_up_pallas(x2, params))
    ref2 = xzh_up_ref(x2, params)
    assert out2.shape == (1, C_in // 4, 45, 80), out2.shape
    err2 = jnp.max(jnp.abs(out2 - ref2))
    assert jnp.allclose(out2, ref2, rtol=2e-2, atol=2e-2), f"max abs err {err2}"

    print("KERNEL_OK")
</pallas_src>

<mosaic_0001>
module attributes {stable_mosaic.version = 11 : i64} {
  func.func @_kernel(%arg0: i32, %arg1: i32, %arg2: memref<1x16x768xf32, #tpu.memory_space<vmem>>, %arg3: memref<768x128xf32, #tpu.memory_space<vmem>>, %arg4: memref<1x128xf32, #tpu.memory_space<vmem>>, %arg5: memref<16x16xf32, #tpu.memory_space<vmem>>, %arg6: memref<128x128xf32, #tpu.memory_space<vmem>>, %arg7: memref<1x16x128xf32, #tpu.memory_space<vmem>>) attributes {dimension_semantics = [#tpu.dimension_semantics<parallel>, #tpu.dimension_semantics<parallel>], iteration_bounds = array<i64: 2, 2>, scalar_prefetch = 0 : i64, scratch_operands = 0 : i64, tpu.core_type = #tpu.core_type<tc>, window_params = [{transform_indices = @transform_0, window_bounds = array<i64: 1, 16, 768>}, {pipeline_mode = #tpu.pipeline_mode<synchronous>, transform_indices = @transform_1, window_bounds = array<i64: 768, 128>}, {pipeline_mode = #tpu.pipeline_mode<synchronous>, transform_indices = @transform_2, window_bounds = array<i64: 1, 128>}, {transform_indices = @transform_3, window_bounds = array<i64: 16, 16>}, {pipeline_mode = #tpu.pipeline_mode<synchronous>, transform_indices = @transform_4, window_bounds = array<i64: 128, 128>}, {transform_indices = @transform_5, window_bounds = array<i64: 1, 16, 128>}]} {
    %c0 = arith.constant 0 : index
    %c0_0 = arith.constant 0 : index
    %c0_1 = arith.constant 0 : index
    %0 = vector.load %arg2[%c0, %c0_0, %c0_1] : memref<1x16x768xf32, #tpu.memory_space<vmem>>, vector<1x16x768xf32>
    %1 = vector.shape_cast %0 : vector<1x16x768xf32> to vector<16x768xf32>
    %c0_2 = arith.constant 0 : index
    %c0_3 = arith.constant 0 : index
    %2 = vector.load %arg3[%c0_2, %c0_3] : memref<768x128xf32, #tpu.memory_space<vmem>>, vector<768x128xf32>
    %cst = arith.constant dense<0.000000e+00> : vector<16x128xf32>
    %3 = tpu.matmul %1, %2, %cst {dimension_numbers = #tpu.dot_dimension_numbers<[1], [0], [0], [1], [0, 0, 1, 1], [], []>} : vector<16x768xf32>, vector<768x128xf32>, vector<16x128xf32> -> vector<16x128xf32>
    %c0_4 = arith.constant 0 : index
    %c0_5 = arith.constant 0 : index
    %4 = vector.load %arg4[%c0_4, %c0_5] : memref<1x128xf32, #tpu.memory_space<vmem>>, vector<1x128xf32>
    %5 = vector.broadcast %4 : vector<1x128xf32> to vector<16x128xf32>
    %6 = arith.addf %3, %5 : vector<16x128xf32>
    %cst_6 = arith.constant 0.000000e+00 : f32
    %7 = vector.broadcast %cst_6 : f32 to vector<16x128xf32>
    %8 = arith.maximumf %6, %7 : vector<16x128xf32>
    %c0_7 = arith.constant 0 : index
    %c0_8 = arith.constant 0 : index
    %9 = vector.load %arg5[%c0_7, %c0_8] : memref<16x16xf32, #tpu.memory_space<vmem>>, vector<16x16xf32>
    %cst_9 = arith.constant dense<0.000000e+00> : vector<16x128xf32>
    %10 = tpu.matmul %9, %8, %cst_9 {dimension_numbers = #tpu.dot_dimension_numbers<[1], [0], [0], [1], [0, 0, 1, 1], [], []>} : vector<16x16xf32>, vector<16x128xf32>, vector<16x128xf32> -> vector<16x128xf32>
    %c0_10 = arith.constant 0 : index
    %c0_11 = arith.constant 0 : index
    %11 = vector.load %arg6[%c0_10, %c0_11] : memref<128x128xf32, #tpu.memory_space<vmem>>, vector<128x128xf32>
    %cst_12 = arith.constant dense<0.000000e+00> : vector<16x128xf32>
    %12 = tpu.matmul %10, %11, %cst_12 {dimension_numbers = #tpu.dot_dimension_numbers<[1], [0], [0], [1], [0, 0, 1, 1], [], []>} : vector<16x128xf32>, vector<128x128xf32>, vector<16x128xf32> -> vector<16x128xf32>
    %c0_13 = arith.constant 0 : index
    %c0_14 = arith.constant 0 : index
    %c0_15 = arith.constant 0 : index
    %13 = vector.load %arg7[%c0_13, %c0_14, %c0_15] : memref<1x16x128xf32, #tpu.memory_space<vmem>>, vector<1x16x128xf32>
    %14 = vector.shape_cast %13 : vector<1x16x128xf32> to vector<16x128xf32>
    %15 = vector.shape_cast %12 : vector<16x128xf32> to vector<1x16x128xf32>
    tpu.vector_store %arg7[%c0_13, %c0_14, %c0_15], %15 {strides = array<i32>} : memref<1x16x128xf32, #tpu.memory_space<vmem>>, vector<1x16x128xf32>,
    return
  }
  func.func @transform_0(%arg0: i32, %arg1: i32) -> (i32, i32, i32) {
    %c0_i32 = arith.constant 0 : i32
    %c0_i32_0 = arith.constant 0 : i32
    %c0_i32_1 = arith.constant 0 : i32
    return %arg0, %c0_i32, %c0_i32_0 : i32, i32, i32
  }
  func.func @transform_1(%arg0: i32, %arg1: i32) -> (i32, i32) {
    %c0_i32 = arith.constant 0 : i32
    %c0_i32_0 = arith.constant 0 : i32
    %c0_i32_1 = arith.constant 0 : i32
    return %c0_i32, %c0_i32_0 : i32, i32
  }
  func.func @transform_2(%arg0: i32, %arg1: i32) -> (i32, i32) {
    %c0_i32 = arith.constant 0 : i32
    %c0_i32_0 = arith.constant 0 : i32
    %c0_i32_1 = arith.constant 0 : i32
    return %c0_i32, %c0_i32_0 : i32, i32
  }
  func.func @transform_3(%arg0: i32, %arg1: i32) -> (i32, i32) {
    %c0_i32 = arith.constant 0 : i32
    %c0_i32_0 = arith.constant 0 : i32
    return %arg1, %c0_i32 : i32, i32
  }
  func.func @transform_4(%arg0: i32, %arg1: i32) -> (i32, i32) {
    %c0_i32 = arith.constant 0 : i32
    %c0_i32_0 = arith.constant 0 : i32
    %c0_i32_1 = arith.constant 0 : i32
    return %c0_i32, %c0_i32_0 : i32, i32
  }
  func.func @transform_5(%arg0: i32, %arg1: i32) -> (i32, i32, i32) {
    %c0_i32 = arith.constant 0 : i32
    %c0_i32_0 = arith.constant 0 : i32
    return %arg0, %arg1, %c0_i32 : i32, i32, i32
  }
}

</mosaic_0001>

<llo_original>
// kernel: tpu_custom_call.1
$region0: #{tpu_custom_call.1}
  #allocation0 [shape = 'u32[]', space=smem, size = 0x4, offset = 0x4, fixed_abs, tag = 'smem constant byte address 0x4 - core index']
  #allocation1 [shape = 'u32[144,128]{1,0:T(1,128)}', space=vmem, size = 0x12000, scoped, tag = 'internal scratch']
  %s0 = inlined_call_operand.hbm [shape: f32[2,16,768], index: 0, kind: input, shape index: {}]
  %s1 = inlined_call_operand.hbm [shape: f32[768,128], index: 1, kind: input, shape index: {}]
  %s2 = inlined_call_operand.vmem [shape: f32[1,128], index: 2, kind: input, shape index: {}]
  %s3 = inlined_call_operand.vmem [shape: f32[32,16], index: 3, kind: input, shape index: {}]
  %s4 = inlined_call_operand.hbm [shape: f32[128,128], index: 4, kind: input, shape index: {}]
  %s5 = inlined_call_operand.hbm [shape: f32[2,32,128], index: 5, kind: output, shape index: {}]
  %s6 = sld [smem:[#allocation0]]
  $region65: #{tpu_custom_call.1} parent=0
    _
  %s8 = ssub.s32 1, %s6
  %s9 = scalar_select 0, %s8, %s6
  $region1: #{tpu_custom_call.1} parent=0
    #allocation2 [shape = 'u8[98304]{0}', space=vmem, size = 0x18000, scoped, tag = 'input window, operand 0']
    #allocation3 [shape = 's32[2]{0}', space=sflag, size = 0x8, scoped, tag = 'scoped memory for tpu_custom_call.1']
    #allocation4 [shape = 's32[2]{0}', space=sflag, size = 0x8, scoped, tag = 'scoped memory for tpu_custom_call.1']
    #allocation5 [shape = 'u8[393216]{0}', space=vmem, size = 0x60000, scoped, tag = 'input window, operand 1, single buffered']
    #allocation6 [shape = 's32[1]{0}', space=sflag, size = 0x4, scoped, tag = 'scoped memory for tpu_custom_call.1']
    #allocation7 [shape = 'u8[65536]{0}', space=vmem, size = 0x10000, scoped, tag = 'input window, operand 4, single buffered']
    #allocation8 [shape = 'u8[16384]{0}', space=vmem, size = 0x4000, scoped, tag = 'output window, operand 0']
    %10 = vsyncpa [#allocation3], 0
    %s11 = scalar_lea.sflag [#allocation3], 1
    %12 = vsyncpa %s11, 0
    %13 = vsyncpa [#allocation6], 0
    %14 = vsyncpa [#allocation4], 0
    %s15 = scalar_lea.sflag [#allocation4], 1
    %16 = vsyncpa %s15, 0
    loop: start=0, step=1, limit=6
    $region2: #{tpu_custom_call.1} parent=1 // loop_pre_header
      _
    $region3: #{tpu_custom_call.1} parent=1 // loop_header
      %s18 = sphi 0, %s22
      %p19 = scmp.ge.s32.totalorder %s18, 6
      %s25 = sphi 0, %s37
      %s26 = sphi 0, %s33
      %s27 = sphi 0, %s25
      %s28 = sphi 0, %s26
      %s29 = sphi 0, %s27
      %s30 = sphi 0, %s28
      %s40 = sphi 0, %s42
      %s43 = sphi 0, %s40
      %s44 = sphi 0, %s43
      %s60 = sphi 0, %s44
      %s64 = sphi 0, %s64
      %s66 = sphi 0, %s64
      %s67 = sphi 0, %s66
      %s81 = sphi 0, %s67
      %s85 = sphi 0, %s85
      %s87 = sphi 0, %s85
      %s88 = sphi 0, %s87
      %s102 = sphi 0, %s88
      %s108 = sphi 0, %s110
      %s111 = sphi 0, %s108
      %s112 = sphi 0, %s111
      %s128 = sphi 0, %s112
      %s132 = sphi 0, %s132
      %s134 = sphi 0, %s132
      %s135 = sphi 0, %s134
      %s149 = sphi 0, %s135
      %s157 = sphi 0, %s159
      %s160 = sphi 0, %s157
      %s161 = sphi 0, %s160
      %s177 = sphi 0, %s161
    $region4: #{tpu_custom_call.1} parent=1 // loop_header_branch
      %21 = sbr.rel (%p19) target = $region8
    $region5: #{tpu_custom_call.1} parent=1 // loop_body
      %s23 = ssub.s32 %s18, 1
      %s24 = ssub.s32 %s18, 2
      %s31 = sadd.s32 1, %s26
      %p32 = scmp.ge.s32.totalorder %s31, 2
      %s33 = scalar_select %p32, 0, %s31
      %s34 = sadd.s32 1, %s25
      %s35 = scalar_select %p32, %s34, %s25
      %p36 = scmp.ge.s32.totalorder %s35, 2
      %s37 = scalar_select %p36, 0, %s35
      %s38 = ssub.s32 %s25, %s37
      %p39 = scmp.eq.s32.totalorder %s38, 0
      %s41 = sadd.s32 %s40, 1
      %s42 = scalar_select %p39, %s40, %s41
      %p45 = pneg %p39
      %p46 = scmp.eq.s32.totalorder %s18, 3
      %p47 = por %p45, %p46
      %p48 = scmp.ne.s32.totalorder %s40, %s43
      %p49 = scmp.eq.s32.totalorder %s18, 0
      %p50 = por %p48, %p49
      %p51 = scmp.ne.s32.totalorder %s40, %s43
      %p52 = scmp.eq.s32.totalorder %s23, 3
      %p53 = por %p51, %p52
      %p54 = scmp.ne.s32.totalorder %s43, %s44
      %p55 = scmp.eq.s32.totalorder %s23, 0
      %p56 = por %p54, %p55
      %p57 = scmp.ne.s32.totalorder %s43, %s44
      %p58 = scmp.eq.s32.totalorder %s24, 3
      %p59 = por %p57, %p58
      %p61 = scmp.ne.s32.totalorder %s44, %s60
      %p62 = scmp.eq.s32.totalorder %s24, 0
      %p63 = por %p61, %p62
      %s65 = sadd.s32 %s64, 1
      %p68 = scmp.eq.s32.totalorder %s18, 3
      %p69 = scmp.ne.s32.totalorder %s64, %s66
      %p70 = scmp.eq.s32.totalorder %s18, 0
      %p71 = por %p69, %p70
      %p72 = scmp.ne.s32.totalorder %s64, %s66
      %p73 = scmp.eq.s32.totalorder %s23, 3
      %p74 = por %p72, %p73
      %p75 = scmp.ne.s32.totalorder %s66, %s67
      %p76 = scmp.eq.s32.totalorder %s23, 0
      %p77 = por %p75, %p76
      %p78 = scmp.ne.s32.totalorder %s66, %s67
      %p79 = scmp.eq.s32.totalorder %s24, 3
      %p80 = por %p78, %p79
      %p82 = scmp.ne.s32.totalorder %s67, %s81
      %p83 = scmp.eq.s32.totalorder %s24, 0
      %p84 = por %p82, %p83
      %s86 = sadd.s32 %s85, 1
      %p89 = scmp.eq.s32.totalorder %s18, 3
      %p90 = scmp.ne.s32.totalorder %s85, %s87
      %p91 = scmp.eq.s32.totalorder %s18, 0
      %p92 = por %p90, %p91
      %p93 = scmp.ne.s32.totalorder %s85, %s87
      %p94 = scmp.eq.s32.totalorder %s23, 3
      %p95 = por %p93, %p94
      %p96 = scmp.ne.s32.totalorder %s87, %s88
      %p97 = scmp.eq.s32.totalorder %s23, 0
      %p98 = por %p96, %p97
      %p99 = scmp.ne.s32.totalorder %s87, %s88
      %p100 = scmp.eq.s32.totalorder %s24, 3
      %p101 = por %p99, %p100
      %p103 = scmp.ne.s32.totalorder %s88, %s102
      %p104 = scmp.eq.s32.totalorder %s24, 0
      %p105 = por %p103, %p104
      %s106 = ssub.s32 %s26, %s33
      %p107 = scmp.eq.s32.totalorder %s106, 0
      %s109 = sadd.s32 %s108, 1
      %s110 = scalar_select %p107, %s108, %s109
      %p113 = pneg %p107
      %p114 = scmp.eq.s32.totalorder %s18, 3
      %p115 = por %p113, %p114
      %p116 = scmp.ne.s32.totalorder %s108, %s111
      %p117 = scmp.eq.s32.totalorder %s18, 0
      %p118 = por %p116, %p117
      %p119 = scmp.ne.s32.totalorder %s108, %s111
      %p120 = scmp.eq.s32.totalorder %s23, 3
      %p121 = por %p119, %p120
      %p122 = scmp.ne.s32.totalorder %s111, %s112
      %p123 = scmp.eq.s32.totalorder %s23, 0
      %p124 = por %p122, %p123
      %p125 = scmp.ne.s32.totalorder %s111, %s112
      %p126 = scmp.eq.s32.totalorder %s24, 3
      %p127 = por %p125, %p126
      %p129 = scmp.ne.s32.totalorder %s112, %s128
      %p130 = scmp.eq.s32.totalorder %s24, 0
      %p131 = por %p129, %p130
      %s133 = sadd.s32 %s132, 1
      %p136 = scmp.eq.s32.totalorder %s18, 3
      %p137 = scmp.ne.s32.totalorder %s132, %s134
      %p138 = scmp.eq.s32.totalorder %s18, 0
      %p139 = por %p137, %p138
      %p140 = scmp.ne.s32.totalorder %s132, %s134
      %p141 = scmp.eq.s32.totalorder %s23, 3
      %p142 = por %p140, %p141
      %p143 = scmp.ne.s32.totalorder %s134, %s135
      %p144 = scmp.eq.s32.totalorder %s23, 0
      %p145 = por %p143, %p144
      %p146 = scmp.ne.s32.totalorder %s134, %s135
      %p147 = scmp.eq.s32.totalorder %s24, 3
      %p148 = por %p146, %p147
      %p150 = scmp.ne.s32.totalorder %s135, %s149
      %p151 = scmp.eq.s32.totalorder %s24, 0
      %p152 = por %p150, %p151
      %s153 = ssub.s32 %s25, %s37
      %s154 = ssub.s32 %s26, %s33
      %s155 = sor.u32 %s153, %s154
      %p156 = scmp.eq.s32.totalorder %s155, 0
      %s158 = sadd.s32 %s157, 1
      %s159 = scalar_select %p156, %s157, %s158
      %p162 = pneg %p156
      %p163 = scmp.eq.s32.totalorder %s18, 3
      %p164 = por %p162, %p163
      %p165 = scmp.ne.s32.totalorder %s157, %s160
      %p166 = scmp.eq.s32.totalorder %s18, 0
      %p167 = por %p165, %p166
      %p168 = scmp.ne.s32.totalorder %s157, %s160
      %p169 = scmp.eq.s32.totalorder %s23, 3
      %p170 = por %p168, %p169
      %p171 = scmp.ne.s32.totalorder %s160, %s161
      %p172 = scmp.eq.s32.totalorder %s23, 0
      %p173 = por %p171, %p172
      %p174 = scmp.ne.s32.totalorder %s160, %s161
      %p175 = scmp.eq.s32.totalorder %s24, 3
      %p176 = por %p174, %p175
      %p178 = scmp.ne.s32.totalorder %s161, %s177
      %p179 = scmp.eq.s32.totalorder %s24, 0
      %p180 = por %p178, %p179
      %p181 = scmp.le.s32.totalorder 1, %s18
      %p182 = scmp.lt.s32.totalorder %s18, 5
      %p183 = pnand %p181, %p182
      %p184 = pneg %p183
      // Predicated region
      $region9: #{tpu_custom_call.1} parent=5 // pred_check
        _
      $region10: #{tpu_custom_call.1} parent=5 // pred_check_branch
        %186 = sbr.rel (%p183) target = $region12
      $region11: #{tpu_custom_call.1} parent=5 // pred_region
        %s187 = ssub.s32 %s18, 1
        // Predicated region
        $region13: #{tpu_custom_call.1} parent=11 // pred_check
          %p188 = pneg %p77
        $region14: #{tpu_custom_call.1} parent=11 // pred_check_branch
          %190 = sbr.rel (%p188) target = $region16
        $region15: #{tpu_custom_call.1} parent=11 // pred_region
          %s192 = ssub.s32 12288, 12288
          %193 = vsyncadd [#allocation6], %s192
          %s194 = sshll.u32 [#allocation5], 4
          %s195 = int_to_ptr.vmem [resolvable:$true] %s194
          %200 = dma.hbm_to_vmem [thread:$0]  %s1, 12288, %s195, [#allocation6], 128, 128, 8
        $region16: #{tpu_custom_call.1} parent=11 // pred_fallthru
          _
        // Predicated region
        $region17: #{tpu_custom_call.1} parent=11 // pred_check
          %p201 = pneg %p98
        $region18: #{tpu_custom_call.1} parent=11 // pred_check_branch
          %203 = sbr.rel (%p201) target = $region20
        $region19: #{tpu_custom_call.1} parent=11 // pred_region
          _
        $region20: #{tpu_custom_call.1} parent=11 // pred_fallthru
          _
        // Predicated region
        $region21: #{tpu_custom_call.1} parent=11 // pred_check
          %p204 = pneg %p145
        $region22: #{tpu_custom_call.1} parent=11 // pred_check_branch
          %206 = sbr.rel (%p204) target = $region24
        $region23: #{tpu_custom_call.1} parent=11 // pred_region
          %s208 = ssub.s32 2048, 2048
          %209 = vsyncadd [#allocation6], %s208
          %s210 = sshll.u32 [#allocation7], 4
          %s211 = int_to_ptr.vmem [resolvable:$true] %s210
          %216 = dma.hbm_to_vmem [thread:$0]  %s4, 2048, %s211, [#allocation6], 128, 128, 8
        $region24: #{tpu_custom_call.1} parent=11 // pred_fallthru
          _
      $region12: #{tpu_custom_call.1} parent=5 // pred_fallthru
        _
      %p217 = scmp.lt.s32.totalorder %s18, 4
      // Predicated region
      $region25: #{tpu_custom_call.1} parent=5 // pred_check
        %p218 = pneg %p217
      $region26: #{tpu_custom_call.1} parent=5 // pred_check_branch
        %220 = sbr.rel (%p218) target = $region28
      $region27: #{tpu_custom_call.1} parent=5 // pred_region
        // Predicated region
        $region29: #{tpu_custom_call.1} parent=27 // pred_check
          %p221 = pneg %p50
        $region30: #{tpu_custom_call.1} parent=27 // pred_check_branch
          %223 = sbr.rel (%p221) target = $region32
        $region31: #{tpu_custom_call.1} parent=27 // pred_region
          %s224 = sand.u32 %s40, 1
          %s225 = scalar_lea.sflag [#allocation3], %s224
          %s226 = sand.u32 %s40, 1
          %s227 = smul.addr %s226, 96
          %s228 = scalar_lea.vmem [#allocation2], %s227
          %s230 = ssub.s32 1536, 1536
          %231 = vsyncadd %s225, %s230
          %s232 = smul.addr %s25, 12
          %s233 = smul.addr %s232, 128
          %s234 = scalar_lea.hbm %s0, %s233
          %s235 = sshll.u32 %s228, 4
          %s236 = int_to_ptr.vmem [resolvable:$true] %s235
          %241 = dma.hbm_to_vmem [thread:$0]  %s234, 1536, %s236, %s225, 768, 768, 48
        $region32: #{tpu_custom_call.1} parent=27 // pred_fallthru
          _
        // Predicated region
        $region33: #{tpu_custom_call.1} parent=27 // pred_check
          %p242 = pneg %p118
        $region34: #{tpu_custom_call.1} parent=27 // pred_check_branch
          %244 = sbr.rel (%p242) target = $region36
        $region35: #{tpu_custom_call.1} parent=27 // pred_region
          %s245 = smul.u32 2, %s26
          %p246 = scmp.lt.s32.totalorder %s245, 3
          %s247 = scalar_select %p246, %s245, 3
          %s248 = smul.addr %s247, 8
          %s249 = scalar_lea.vmem %s3, %s248
          %s250 = smul.u32 2, %s26
        $region36: #{tpu_custom_call.1} parent=27 // pred_fallthru
          _
      $region28: #{tpu_custom_call.1} parent=5 // pred_fallthru
        _
      %p251 = scmp.le.s32.totalorder 1, %s18
      %p252 = scmp.lt.s32.totalorder %s18, 5
      %p253 = pnand %p251, %p252
      %p254 = pneg %p253
      // Predicated region
      $region37: #{tpu_custom_call.1} parent=5 // pred_check
        _
      $region38: #{tpu_custom_call.1} parent=5 // pred_check_branch
        %256 = sbr.rel (%p253) target = $region40
      $region39: #{tpu_custom_call.1} parent=5 // pred_region
        %s257 = ssub.s32 %s18, 1
        %s258 = sand.u32 %s43, 1
        %s259 = scalar_lea.sflag [#allocation3], %s258
        %s260 = sand.u32 %s43, 1
        %s261 = smul.addr %s260, 96
        %s262 = scalar_lea.vmem [#allocation2], %s261
        // Predicated region
        $region41: #{tpu_custom_call.1} parent=39 // pred_check
          %p263 = pneg %p56
        $region42: #{tpu_custom_call.1} parent=39 // pred_check_branch
          %265 = sbr.rel (%p263) target = $region44
        $region43: #{tpu_custom_call.1} parent=39 // pred_region
          %266 = dma.done %s259, 1536
        $region44: #{tpu_custom_call.1} parent=39 // pred_fallthru
          _
        // Predicated region
        $region45: #{tpu_custom_call.1} parent=39 // pred_check
          %p267 = pneg %p77
        $region46: #{tpu_custom_call.1} parent=39 // pred_check_branch
          %269 = sbr.rel (%p267) target = $region48
        $region47: #{tpu_custom_call.1} parent=39 // pred_region
          %270 = dma.done [#allocation6], 12288
        $region48: #{tpu_custom_call.1} parent=39 // pred_fallthru
          _
        // Predicated region
        $region49: #{tpu_custom_call.1} parent=39 // pred_check
          %p271 = pneg %p145
        $region50: #{tpu_custom_call.1} parent=39 // pred_check_branch
          %273 = sbr.rel (%p271) target = $region52
        $region51: #{tpu_custom_call.1} parent=39 // pred_region
          %274 = dma.done [#allocation6], 2048
        $region52: #{tpu_custom_call.1} parent=39 // pred_fallthru
          _
        %s275 = sand.u32 %s43, 1
        %s276 = scalar_lea.sflag [#allocation3], %s275
        %s277 = sand.u32 %s43, 1
        %s278 = smul.addr %s277, 96
        %s279 = scalar_lea.vmem [#allocation2], %s278
        %p280 = pneg %p56
        %p281 = pneg %p53
        %p282 = pneg %p77
        %p283 = pneg %p74
        %p284 = pneg %p98
        %p285 = pneg %p95
        %s286 = smul.u32 2, %s28
        %p287 = scmp.lt.s32.totalorder %s286, 3
        %s288 = scalar_select %p287, %s286, 3
        %s289 = smul.addr %s288, 8
        %s290 = scalar_lea.vmem %s3, %s289
        %p291 = pneg %p124
        %p292 = pneg %p121
        %p293 = pneg %p145
        %p294 = pneg %p142
        %p295 = pneg %p173
        %p296 = pneg %p170
        %s297 = sand.u32 %s160, 1
        %s298 = scalar_lea.sflag [#allocation4], %s297
        %s299 = sand.u32 %s160, 1
        %s300 = smul.addr %s299, 16
        %s301 = scalar_lea.vmem [#allocation8], %s300
        %s302 = smul.u32 2, %s28
        %p303 = scmp.lt.s32.totalorder %s302, 3
        %s304 = scalar_select %p303, %s302, 3
        %s305 = smul.addr %s304, 8
        %s306 = scalar_lea.vmem %s3, %s305
        %s307 = smul.u32 2, %s28
        %s308 = smul.u32 2, %s28
        %v309 = vld [vmem:[%s262] sm:$0xff]
        %v310 = vld [vmem:[%s262 + $0x8] sm:$0xff]
        %v311 = vld [vmem:[%s262 + $0x10] sm:$0xff]
        %v312 = vld [vmem:[%s262 + $0x18] sm:$0xff]
        %v313 = vld [vmem:[%s262 + $0x20] sm:$0xff]
        %v314 = vld [vmem:[%s262 + $0x28] sm:$0xff]
        %v315 = vld [vmem:[%s262 + $0x30] sm:$0xff]
        %v316 = vld [vmem:[%s262 + $0x38] sm:$0xff]
        %v317 = vld [vmem:[%s262 + $0x40] sm:$0xff]
        %v318 = vld [vmem:[%s262 + $0x48] sm:$0xff]
        %v319 = vld [vmem:[%s262 + $0x50] sm:$0xff]
        %v320 = vld [vmem:[%s262 + $0x58] sm:$0xff]
        %v321 = vld [vmem:[#allocation5] sm:$0xff]
        %v322 = vld [vmem:[#allocation5 + $0x8] sm:$0xff]
        %v323 = vld [vmem:[#allocation5 + $0x10] sm:$0xff]
        %v324 = vld [vmem:[#allocation5 + $0x18] sm:$0xff]
        %v325 = vld [vmem:[#allocation5 + $0x20] sm:$0xff]
        %v326 = vld [vmem:[#allocation5 + $0x28] sm:$0xff]
        %v327 = vld [vmem:[#allocation5 + $0x30] sm:$0xff]
        %v328 = vld [vmem:[#allocation5 + $0x38] sm:$0xff]
        %v329 = vld [vmem:[#allocation5 + $0x40] sm:$0xff]
        %v330 = vld [vmem:[#allocation5 + $0x48] sm:$0xff]
        %v331 = vld [vmem:[#allocation5 + $0x50] sm:$0xff]
        %v332 = vld [vmem:[#allocation5 + $0x58] sm:$0xff]
        %v333 = vld [vmem:[#allocation5 + $0x60] sm:$0xff]
        %v334 = vld [vmem:[#allocation5 + $0x68] sm:$0xff]
        %v335 = vld [vmem:[#allocation5 + $0x70] sm:$0xff]
        %v336 = vld [vmem:[#allocation5 + $0x78] sm:$0xff]
        %v337 = vld [vmem:[#allocation5 + $0x80] sm:$0xff]
        %v338 = vld [vmem:[#allocation5 + $0x88] sm:$0xff]
        %v339 = vld [vmem:[#allocation5 + $0x90] sm:$0xff]
        %v340 = vld [vmem:[#allocation5 + $0x98] sm:$0xff]
        %v341 = vld [vmem:[#allocation5 + $0xa0] sm:$0xff]
        %v342 = vld [vmem:[#allocation5 + $0xa8] sm:$0xff]
        %v343 = vld [vmem:[#allocation5 + $0xb0] sm:$0xff]
        %v344 = vld [vmem:[#allocation5 + $0xb8] sm:$0xff]
        %v345 = vld [vmem:[#allocation5 + $0xc0] sm:$0xff]
        %v346 = vld [vmem:[#allocation5 + $0xc8] sm:$0xff]
        %v347 = vld [vmem:[#allocation5 + $0xd0] sm:$0xff]
        %v348 = vld [vmem:[#allocation5 + $0xd8] sm:$0xff]
        %v349 = vld [vmem:[#allocation5 + $0xe0] sm:$0xff]
        %v350 = vld [vmem:[#allocation5 + $0xe8] sm:$0xff]
        %v351 = vld [vmem:[#allocation5 + $0xf0] sm:$0xff]
        %v352 = vld [vmem:[#allocation5 + $0xf8] sm:$0xff]
        %v353 = vld [vmem:[#allocation5 + $0x100] sm:$0xff]
        %v354 = vld [vmem:[#allocation5 + $0x108] sm:$0xff]
        %v355 = vld [vmem:[#allocation5 + $0x110] sm:$0xff]
        %v356 = vld [vmem:[#allocation5 + $0x118] sm:$0xff]
        %v357 = vld [vmem:[#allocation5 + $0x120] sm:$0xff]
        %v358 = vld [vmem:[#allocation5 + $0x128] sm:$0xff]
        %v359 = vld [vmem:[#allocation5 + $0x130] sm:$0xff]
        %v360 = vld [vmem:[#allocation5 + $0x138] sm:$0xff]
        %v361 = vld [vmem:[#allocation5 + $0x140] sm:$0xff]
        %v362 = vld [vmem:[#allocation5 + $0x148] sm:$0xff]
        %v363 = vld [vmem:[#allocation5 + $0x150] sm:$0xff]
        %v364 = vld [vmem:[#allocation5 + $0x158] sm:$0xff]
        %v365 = vld [vmem:[#allocation5 + $0x160] sm:$0xff]
        %v366 = vld [vmem:[#allocation5 + $0x168] sm:$0xff]
        %v367 = vld [vmem:[#allocation5 + $0x170] sm:$0xff]
        %v368 = vld [vmem:[#allocation5 + $0x178] sm:$0xff]
        %v369 = vld [vmem:[#allocation5 + $0x180] sm:$0xff]
        %v370 = vld [vmem:[#allocation5 + $0x188] sm:$0xff]
        %v371 = vld [vmem:[#allocation5 + $0x190] sm:$0xff]
        %v372 = vld [vmem:[#allocation5 + $0x198] sm:$0xff]
        %v373 = vld [vmem:[#allocation5 + $0x1a0] sm:$0xff]
        %v374 = vld [vmem:[#allocation5 + $0x1a8] sm:$0xff]
        %v375 = vld [vmem:[#allocation5 + $0x1b0] sm:$0xff]
        %v376 = vld [vmem:[#allocation5 + $0x1b8] sm:$0xff]
        %v377 = vld [vmem:[#allocation5 + $0x1c0] sm:$0xff]
        %v378 = vld [vmem:[#allocation5 + $0x1c8] sm:$0xff]
        %v379 = vld [vmem:[#allocation5 + $0x1d0] sm:$0xff]
        %v380 = vld [vmem:[#allocation5 + $0x1d8] sm:$0xff]
        %v381 = vld [vmem:[#allocation5 + $0x1e0] sm:$0xff]
        %v382 = vld [vmem:[#allocation5 + $0x1e8] sm:$0xff]
        %v383 = vld [vmem:[#allocation5 + $0x1f0] sm:$0xff]
        %v384 = vld [vmem:[#allocation5 + $0x1f8] sm:$0xff]
        %v385 = vld [vmem:[#allocation5 + $0x200] sm:$0xff]
        %v386 = vld [vmem:[#allocation5 + $0x208] sm:$0xff]
        %v387 = vld [vmem:[#allocation5 + $0x210] sm:$0xff]
        %v388 = vld [vmem:[#allocation5 + $0x218] sm:$0xff]
        %v389 = vld [vmem:[#allocation5 + $0x220] sm:$0xff]
        %v390 = vld [vmem:[#allocation5 + $0x228] sm:$0xff]
        %v391 = vld [vmem:[#allocation5 + $0x230] sm:$0xff]
        %v392 = vld [vmem:[#allocation5 + $0x238] sm:$0xff]
        %v393 = vld [vmem:[#allocation5 + $0x240] sm:$0xff]
        %v394 = vld [vmem:[#allocation5 + $0x248] sm:$0xff]
        %v395 = vld [vmem:[#allocation5 + $0x250] sm:$0xff]
        %v396 = vld [vmem:[#allocation5 + $0x258] sm:$0xff]
        %v397 = vld [vmem:[#allocation5 + $0x260] sm:$0xff]
        %v398 = vld [vmem:[#allocation5 + $0x268] sm:$0xff]
        %v399 = vld [vmem:[#allocation5 + $0x270] sm:$0xff]
        %v400 = vld [vmem:[#allocation5 + $0x278] sm:$0xff]
        %v401 = vld [vmem:[#allocation5 + $0x280] sm:$0xff]
        %v402 = vld [vmem:[#allocation5 + $0x288] sm:$0xff]
        %v403 = vld [vmem:[#allocation5 + $0x290] sm:$0xff]
        %v404 = vld [vmem:[#allocation5 + $0x298] sm:$0xff]
        %v405 = vld [vmem:[#allocation5 + $0x2a0] sm:$0xff]
        %v406 = vld [vmem:[#allocation5 + $0x2a8] sm:$0xff]
        %v407 = vld [vmem:[#allocation5 + $0x2b0] sm:$0xff]
        %v408 = vld [vmem:[#allocation5 + $0x2b8] sm:$0xff]
        %v409 = vld [vmem:[#allocation5 + $0x2c0] sm:$0xff]
        %v410 = vld [vmem:[#allocation5 + $0x2c8] sm:$0xff]
        %v411 = vld [vmem:[#allocation5 + $0x2d0] sm:$0xff]
        %v412 = vld [vmem:[#allocation5 + $0x2d8] sm:$0xff]
        %v413 = vld [vmem:[#allocation5 + $0x2e0] sm:$0xff]
        %v414 = vld [vmem:[#allocation5 + $0x2e8] sm:$0xff]
        %v415 = vld [vmem:[#allocation5 + $0x2f0] sm:$0xff]
        %v416 = vld [vmem:[#allocation5 + $0x2f8] sm:$0xff]
        %v417 = vld [vmem:[%s2] sm:$0x1]
        %v419 = vlaneseq
        %v420 = vshrl.u32 %v419, 7
        %v421 = vsub.s32 0, %v420
        %v422 = vrot.slane %v417, %v421
        %424 = vmatprep.subr.mxu0 0.0
        %425 = vmatpush1.msra.mxu0 %v321
        %426 = vmatprep.subr.mxu0 0.0
        %427 = vmatpush1.msra.mxu0 %v322
        %428 = vmatprep.subr.mxu0 0.0
        %429 = vmatpush1.msra.mxu0 %v323
        %430 = vmatprep.subr.mxu0 0.0
        %431 = vmatpush1.msra.mxu0 %v324
        %432 = vmatprep.subr.mxu0 0.0
        %433 = vmatpush1.msra.mxu0 %v325
        %434 = vmatprep.subr.mxu0 0.0
        %435 = vmatpush1.msra.mxu0 %v326
        %436 = vmatprep.subr.mxu0 0.0
        %437 = vmatpush1.msra.mxu0 %v327
        %438 = vmatprep.subr.mxu0 0.0
        %439 = vmatpush1.msra.mxu0 %v328
        %440 = vmatprep.subr.mxu0 0.0
        %441 = vmatpush1.msra.mxu0 %v329
        %442 = vmatprep.subr.mxu0 0.0
        %443 = vmatpush1.msra.mxu0 %v330
        %444 = vmatprep.subr.mxu0 0.0
        %445 = vmatpush1.msra.mxu0 %v331
        %446 = vmatprep.subr.mxu0 0.0
        %447 = vmatpush1.msra.mxu0 %v332
        %448 = vmatprep.subr.mxu0 0.0
        %449 = vmatpush1.msra.mxu0 %v333
        %450 = vmatprep.subr.mxu0 0.0
        %451 = vmatpush1.msra.mxu0 %v334
        %452 = vmatprep.subr.mxu0 0.0
        %453 = vmatpush1.msra.mxu0 %v335
        %454 = vmatprep.subr.mxu0 0.0
        %455 = vmatpush1.msra.mxu0 %v336
        %456 = vmatprep.subr.mxu0 0.0
        %457 = vmatpush1.msra.mxu0 %v337
        %458 = vmatprep.subr.mxu0 0.0
        %459 = vmatpush1.msra.mxu0 %v338
        %460 = vmatprep.subr.mxu0 0.0
        %461 = vmatpush1.msra.mxu0 %v339
        %462 = vmatprep.subr.mxu0 0.0
        %463 = vmatpush1.msra.mxu0 %v340
        %464 = vmatprep.subr.mxu0 0.0
        %465 = vmatpush1.msra.mxu0 %v341
        %466 = vmatprep.subr.mxu0 0.0
        %467 = vmatpush1.msra.mxu0 %v342
        %468 = vmatprep.subr.mxu0 0.0
        %469 = vmatpush1.msra.mxu0 %v343
        %470 = vmatprep.subr.mxu0 0.0
        %471 = vmatpush1.msra.mxu0 %v344
        %472 = vmatprep.subr.mxu0 0.0
        %473 = vmatpush1.msra.mxu0 %v345
        %474 = vmatprep.subr.mxu0 0.0
        %475 = vmatpush1.msra.mxu0 %v346
        %476 = vmatprep.subr.mxu0 0.0
        %477 = vmatpush1.msra.mxu0 %v347
        %478 = vmatprep.subr.mxu0 0.0
        %479 = vmatpush1.msra.mxu0 %v348
        %480 = vmatprep.subr.mxu0 0.0
        %481 = vmatpush1.msra.mxu0 %v349
        %482 = vmatprep.subr.mxu0 0.0
        %483 = vmatpush1.msra.mxu0 %v350
        %484 = vmatprep.subr.mxu0 0.0
        %485 = vmatpush1.msra.mxu0 %v351
        %486 = vmatprep.subr.mxu0 0.0
        %487 = vmatpush1.msra.mxu0 %v352
        %488 = vmatprep.mubr.f32.mxu0 %v310
        %489 = vmatmul.mubr.f32.gmra.mrb[0].mxu0 %v309
        %v490 = vpop.f32.mrb[0].mxu0
        %v491 = vadd.f32 %v422, %v490
        %v492 = vpop.f32.mrb[0].mxu0
        %493 = vmatprep.mubr.f32.mxu0 %v316
        %494 = vmatmul.mubr.f32.gmra.mrb[0].mxu0 %v315
        %v495 = vpop.f32.mrb[0].mxu0
        %v496 = vadd.f32 %v422, %v495
        %v497 = vpop.f32.mrb[0].mxu0
        %498 = vdwg.mxu0
        %499 = vmatprep.subr.mxu0 0.0
        %500 = vmatpush1.msra.mxu0 %v353
        %501 = vmatprep.subr.mxu0 0.0
        %502 = vmatpush1.msra.mxu0 %v354
        %503 = vmatprep.subr.mxu0 0.0
        %504 = vmatpush1.msra.mxu0 %v355
        %505 = vmatprep.subr.mxu0 0.0
        %506 = vmatpush1.msra.mxu0 %v356
        %507 = vmatprep.subr.mxu0 0.0
        %508 = vmatpush1.msra.mxu0 %v357
        %509 = vmatprep.subr.mxu0 0.0
        %510 = vmatpush1.msra.mxu0 %v358
        %511 = vmatprep.subr.mxu0 0.0
        %512 = vmatpush1.msra.mxu0 %v359
        %513 = vmatprep.subr.mxu0 0.0
        %514 = vmatpush1.msra.mxu0 %v360
        %515 = vmatprep.subr.mxu0 0.0
        %516 = vmatpush1.msra.mxu0 %v361
        %517 = vmatprep.subr.mxu0 0.0
        %518 = vmatpush1.msra.mxu0 %v362
        %519 = vmatprep.subr.mxu0 0.0
        %520 = vmatpush1.msra.mxu0 %v363
        %521 = vmatprep.subr.mxu0 0.0
        %522 = vmatpush1.msra.mxu0 %v364
        %523 = vmatprep.subr.mxu0 0.0
        %524 = vmatpush1.msra.mxu0 %v365
        %525 = vmatprep.subr.mxu0 0.0
        %526 = vmatpush1.msra.mxu0 %v366
        %527 = vmatprep.subr.mxu0 0.0
        %528 = vmatpush1.msra.mxu0 %v367
        %529 = vmatprep.subr.mxu0 0.0
        %530 = vmatpush1.msra.mxu0 %v368
        %531 = vmatprep.subr.mxu0 0.0
        %532 = vmatpush1.msra.mxu0 %v369
        %533 = vmatprep.subr.mxu0 0.0
        %534 = vmatpush1.msra.mxu0 %v370
        %535 = vmatprep.subr.mxu0 0.0
        %536 = vmatpush1.msra.mxu0 %v371
        %537 = vmatprep.subr.mxu0 0.0
        %538 = vmatpush1.msra.mxu0 %v372
        %539 = vmatprep.subr.mxu0 0.0
        %540 = vmatpush1.msra.mxu0 %v373
        %541 = vmatprep.subr.mxu0 0.0
        %542 = vmatpush1.msra.mxu0 %v374
        %543 = vmatprep.subr.mxu0 0.0
        %544 = vmatpush1.msra.mxu0 %v375
        %545 = vmatprep.subr.mxu0 0.0
        %546 = vmatpush1.msra.mxu0 %v376
        %547 = vmatprep.subr.mxu0 0.0
        %548 = vmatpush1.msra.mxu0 %v377
        %549 = vmatprep.subr.mxu0 0.0
        %550 = vmatpush1.msra.mxu0 %v378
        %551 = vmatprep.subr.mxu0 0.0
        %552 = vmatpush1.msra.mxu0 %v379
        %553 = vmatprep.subr.mxu0 0.0
        %554 = vmatpush1.msra.mxu0 %v380
        %555 = vmatprep.subr.mxu0 0.0
        %556 = vmatpush1.msra.mxu0 %v381
        %557 = vmatprep.subr.mxu0 0.0
        %558 = vmatpush1.msra.mxu0 %v382
        %559 = vmatprep.subr.mxu0 0.0
        %560 = vmatpush1.msra.mxu0 %v383
        %561 = vmatprep.subr.mxu0 0.0
        %562 = vmatpush1.msra.mxu0 %v384
        %563 = vmatprep.mubr.f32.mxu0 %v312
        %564 = vmatmul.mubr.f32.gmra.mrb[0].mxu0 %v311
        %v565 = vpop.f32.mrb[0].mxu0
        %v566 = vadd.f32 %v491, %v565
        %v567 = vpop.f32.mrb[0].mxu0
        %568 = vmatprep.mubr.f32.mxu0 %v318
        %569 = vmatmul.mubr.f32.gmra.mrb[0].mxu0 %v317
        %v570 = vpop.f32.mrb[0].mxu0
        %v571 = vadd.f32 %v496, %v570
        %v572 = vpop.f32.mrb[0].mxu0
        %573 = vdwg.mxu0
        %574 = vmatprep.subr.mxu0 0.0
        %575 = vmatpush1.msra.mxu0 %v385
        %576 = vmatprep.subr.mxu0 0.0
        %577 = vmatpush1.msra.mxu0 %v386
        %578 = vmatprep.subr.mxu0 0.0
        %579 = vmatpush1.msra.mxu0 %v387
        %580 = vmatprep.subr.mxu0 0.0
        %581 = vmatpush1.msra.mxu0 %v388
        %582 = vmatprep.subr.mxu0 0.0
        %583 = vmatpush1.msra.mxu0 %v389
        %584 = vmatprep.subr.mxu0 0.0
        %585 = vmatpush1.msra.mxu0 %v390
        %586 = vmatprep.subr.mxu0 0.0
        %587 = vmatpush1.msra.mxu0 %v391
        %588 = vmatprep.subr.mxu0 0.0
        %589 = vmatpush1.msra.mxu0 %v392
        %590 = vmatprep.subr.mxu0 0.0
        %591 = vmatpush1.msra.mxu0 %v393
        %592 = vmatprep.subr.mxu0 0.0
        %593 = vmatpush1.msra.mxu0 %v394
        %594 = vmatprep.subr.mxu0 0.0
        %595 = vmatpush1.msra.mxu0 %v395
        %596 = vmatprep.subr.mxu0 0.0
        %597 = vmatpush1.msra.mxu0 %v396
        %598 = vmatprep.subr.mxu0 0.0
        %599 = vmatpush1.msra.mxu0 %v397
        %600 = vmatprep.subr.mxu0 0.0
        %601 = vmatpush1.msra.mxu0 %v398
        %602 = vmatprep.subr.mxu0 0.0
        %603 = vmatpush1.msra.mxu0 %v399
        %604 = vmatprep.subr.mxu0 0.0
        %605 = vmatpush1.msra.mxu0 %v400
        %606 = vmatprep.subr.mxu0 0.0
        %607 = vmatpush1.msra.mxu0 %v401
        %608 = vmatprep.subr.mxu0 0.0
        %609 = vmatpush1.msra.mxu0 %v402
        %610 = vmatprep.subr.mxu0 0.0
        %611 = vmatpush1.msra.mxu0 %v403
        %612 = vmatprep.subr.mxu0 0.0
        %613 = vmatpush1.msra.mxu0 %v404
        %614 = vmatprep.subr.mxu0 0.0
        %615 = vmatpush1.msra.mxu0 %v405
        %616 = vmatprep.subr.mxu0 0.0
        %617 = vmatpush1.msra.mxu0 %v406
        %618 = vmatprep.subr.mxu0 0.0
        %619 = vmatpush1.msra.mxu0 %v407
        %620 = vmatprep.subr.mxu0 0.0
        %621 = vmatpush1.msra.mxu0 %v408
        %622 = vmatprep.subr.mxu0 0.0
        %623 = vmatpush1.msra.mxu0 %v409
        %624 = vmatprep.subr.mxu0 0.0
        %625 = vmatpush1.msra.mxu0 %v410
        %626 = vmatprep.subr.mxu0 0.0
        %627 = vmatpush1.msra.mxu0 %v411
        %628 = vmatprep.subr.mxu0 0.0
        %629 = vmatpush1.msra.mxu0 %v412
        %630 = vmatprep.subr.mxu0 0.0
        %631 = vmatpush1.msra.mxu0 %v413
        %632 = vmatprep.subr.mxu0 0.0
        %633 = vmatpush1.msra.mxu0 %v414
        %634 = vmatprep.subr.mxu0 0.0
        %635 = vmatpush1.msra.mxu0 %v415
        %636 = vmatprep.subr.mxu0 0.0
        %637 = vmatpush1.msra.mxu0 %v416
        %638 = vmatprep.mubr.f32.mxu0 %v314
        %639 = vmatmul.mubr.f32.gmra.mrb[0].mxu0 %v313
        %v640 = vpop.f32.mrb[0].mxu0
        %v641 = vadd.f32 %v566, %v640
        %v642 = vpop.f32.mrb[0].mxu0
        %643 = vmatprep.mubr.f32.mxu0 %v320
        %644 = vmatmul.mubr.f32.gmra.mrb[0].mxu0 %v319
        %v645 = vpop.f32.mrb[0].mxu0
        %v646 = vadd.f32 %v571, %v645
        %v647 = vpop.f32.mrb[0].mxu0
        %648 = vdwg.mxu0
        %v649 = vmax.f32 %v641, 0.0
        %v650 = vmax.f32 %v646, 0.0
        %v651 = vld [vmem:[%s306] sm:$0xff]
        %v652 = vld [vmem:[%s306 + $0x8] sm:$0xff]
        %vm653 = vcmask 130048
        %v655 = vsel %vm653, %v651, 0
        %v658 = vsel %vm653, %v652, 0
        %660 = vmatprep.subr.mxu0 0.0
        %661 = vmatpush1.msra.mxu0 %v649
        %662 = vmatprep.subr.mxu0 0.0
        %663 = vmatpush1.msra.mxu0 %v650
        %664 = vmatprep.subr.mxu0 0.0
        %665 = vmatpush1.msra.mxu0 0.0
        %666 = vmatprep.subr.mxu0 0.0
        %667 = vmatpush1.msra.mxu0 0.0
        %668 = vmatprep.subr.mxu0 0.0
        %669 = vmatpush1.msra.mxu0 0.0
        %670 = vmatprep.subr.mxu0 0.0
        %671 = vmatpush1.msra.mxu0 0.0
        %672 = vmatprep.subr.mxu0 0.0
        %673 = vmatpush1.msra.mxu0 0.0
        %674 = vmatprep.subr.mxu0 0.0
        %675 = vmatpush1.msra.mxu0 0.0
        %676 = vmatprep.subr.mxu0 0.0
        %677 = vmatpush1.msra.mxu0 0.0
        %678 = vmatprep.subr.mxu0 0.0
        %679 = vmatpush1.msra.mxu0 0.0
        %680 = vmatprep.subr.mxu0 0.0
        %681 = vmatpush1.msra.mxu0 0.0
        %682 = vmatprep.subr.mxu0 0.0
        %683 = vmatpush1.msra.mxu0 0.0
        %684 = vmatprep.subr.mxu0 0.0
        %685 = vmatpush1.msra.mxu0 0.0
        %686 = vmatprep.subr.mxu0 0.0
        %687 = vmatpush1.msra.mxu0 0.0
        %688 = vmatprep.subr.mxu0 0.0
        %689 = vmatpush1.msra.mxu0 0.0
        %690 = vmatprep.subr.mxu0 0.0
        %691 = vmatpush1.msra.mxu0 0.0
        %692 = vmatprep.subr.mxu0 0.0
        %693 = vmatpush1.msra.mxu0 0.0
        %694 = vmatprep.subr.mxu0 0.0
        %695 = vmatpush1.msra.mxu0 0.0
        %696 = vmatprep.subr.mxu0 0.0
        %697 = vmatpush1.msra.mxu0 0.0
        %698 = vmatprep.subr.mxu0 0.0
        %699 = vmatpush1.msra.mxu0 0.0
        %700 = vmatprep.subr.mxu0 0.0
        %701 = vmatpush1.msra.mxu0 0.0
        %702 = vmatprep.subr.mxu0 0.0
        %703 = vmatpush1.msra.mxu0 0.0
        %704 = vmatprep.subr.mxu0 0.0
        %705 = vmatpush1.msra.mxu0 0.0
        %706 = vmatprep.subr.mxu0 0.0
        %707 = vmatpush1.msra.mxu0 0.0
        %708 = vmatprep.subr.mxu0 0.0
        %709 = vmatpush1.msra.mxu0 0.0
        %710 = vmatprep.subr.mxu0 0.0
        %711 = vmatpush1.msra.mxu0 0.0
        %712 = vmatprep.subr.mxu0 0.0
        %713 = vmatpush1.msra.mxu0 0.0
        %714 = vmatprep.subr.mxu0 0.0
        %715 = vmatpush1.msra.mxu0 0.0
        %716 = vmatprep.subr.mxu0 0.0
        %717 = vmatpush1.msra.mxu0 0.0
        %718 = vmatprep.subr.mxu0 0.0
        %719 = vmatpush1.msra.mxu0 0.0
        %720 = vmatprep.subr.mxu0 0.0
        %721 = vmatpush1.msra.mxu0 0.0
        %722 = vmatprep.subr.mxu0 0.0
        %723 = vmatpush1.msra.mxu0 0.0
        %724 = vmatprep.mubr.f32.mxu0 0.0
        %725 = vmatmul.mubr.f32.gmra.mrb[0].mxu0 %v655
        %v726 = vpop.f32.mrb[0].mxu0
        %v727 = vadd.f32 0.0, %v726
        %v728 = vpop.f32.mrb[0].mxu0
        %729 = vmatprep.mubr.f32.mxu0 0.0
        %730 = vmatmul.mubr.f32.gmra.mrb[0].mxu0 %v658
        %v731 = vpop.f32.mrb[0].mxu0
        %v732 = vadd.f32 0.0, %v731
        %v733 = vpop.f32.mrb[0].mxu0
        %734 = vdwg.mxu0
        %v735 = vld [vmem:[#allocation7] sm:$0xff]
        %v736 = vld [vmem:[#allocation7 + $0x8] sm:$0xff]
        %v737 = vld [vmem:[#allocation7 + $0x10] sm:$0xff]
        %v738 = vld [vmem:[#allocation7 + $0x18] sm:$0xff]
        %v739 = vld [vmem:[#allocation7 + $0x20] sm:$0xff]
        %v740 = vld [vmem:[#allocation7 + $0x28] sm:$0xff]
        %v741 = vld [vmem:[#allocation7 + $0x30] sm:$0xff]
        %v742 = vld [vmem:[#allocation7 + $0x38] sm:$0xff]
        %v743 = vld [vmem:[#allocation7 + $0x40] sm:$0xff]
        %v744 = vld [vmem:[#allocation7 + $0x48] sm:$0xff]
        %v745 = vld [vmem:[#allocation7 + $0x50] sm:$0xff]
        %v746 = vld [vmem:[#allocation7 + $0x58] sm:$0xff]
        %v747 = vld [vmem:[#allocation7 + $0x60] sm:$0xff]
        %v748 = vld [vmem:[#allocation7 + $0x68] sm:$0xff]
        %v749 = vld [vmem:[#allocation7 + $0x70] sm:$0xff]
        %v750 = vld [vmem:[#allocation7 + $0x78] sm:$0xff]
        %751 = vmatprep.subr.mxu0 0.0
        %752 = vmatpush1.msra.mxu0 %v735
        %753 = vmatprep.subr.mxu0 0.0
        %754 = vmatpush1.msra.mxu0 %v736
        %755 = vmatprep.subr.mxu0 0.0
        %756 = vmatpush1.msra.mxu0 %v737
        %757 = vmatprep.subr.mxu0 0.0
        %758 = vmatpush1.msra.mxu0 %v738
        %759 = vmatprep.subr.mxu0 0.0
        %760 = vmatpush1.msra.mxu0 %v739
        %761 = vmatprep.subr.mxu0 0.0
        %762 = vmatpush1.msra.mxu0 %v740
        %763 = vmatprep.subr.mxu0 0.0
        %764 = vmatpush1.msra.mxu0 %v741
        %765 = vmatprep.subr.mxu0 0.0
        %766 = vmatpush1.msra.mxu0 %v742
        %767 = vmatprep.subr.mxu0 0.0
        %768 = vmatpush1.msra.mxu0 %v743
        %769 = vmatprep.subr.mxu0 0.0
        %770 = vmatpush1.msra.mxu0 %v744
        %771 = vmatprep.subr.mxu0 0.0
        %772 = vmatpush1.msra.mxu0 %v745
        %773 = vmatprep.subr.mxu0 0.0
        %774 = vmatpush1.msra.mxu0 %v746
        %775 = vmatprep.subr.mxu0 0.0
        %776 = vmatpush1.msra.mxu0 %v747
        %777 = vmatprep.subr.mxu0 0.0
        %778 = vmatpush1.msra.mxu0 %v748
        %779 = vmatprep.subr.mxu0 0.0
        %780 = vmatpush1.msra.mxu0 %v749
        %781 = vmatprep.subr.mxu0 0.0
        %782 = vmatpush1.msra.mxu0 %v750
        %783 = vmatprep.subr.mxu0 0.0
        %784 = vmatpush1.msra.mxu0 0.0
        %785 = vmatprep.subr.mxu0 0.0
        %786 = vmatpush1.msra.mxu0 0.0
        %787 = vmatprep.subr.mxu0 0.0
        %788 = vmatpush1.msra.mxu0 0.0
        %789 = vmatprep.subr.mxu0 0.0
        %790 = vmatpush1.msra.mxu0 0.0
        %791 = vmatprep.subr.mxu0 0.0
        %792 = vmatpush1.msra.mxu0 0.0
        %793 = vmatprep.subr.mxu0 0.0
        %794 = vmatpush1.msra.mxu0 0.0
        %795 = vmatprep.subr.mxu0 0.0
        %796 = vmatpush1.msra.mxu0 0.0
        %797 = vmatprep.subr.mxu0 0.0
        %798 = vmatpush1.msra.mxu0 0.0
        %799 = vmatprep.subr.mxu0 0.0
        %800 = vmatpush1.msra.mxu0 0.0
        %801 = vmatprep.subr.mxu0 0.0
        %802 = vmatpush1.msra.mxu0 0.0
        %803 = vmatprep.subr.mxu0 0.0
        %804 = vmatpush1.msra.mxu0 0.0
        %805 = vmatprep.subr.mxu0 0.0
        %806 = vmatpush1.msra.mxu0 0.0
        %807 = vmatprep.subr.mxu0 0.0
        %808 = vmatpush1.msra.mxu0 0.0
        %809 = vmatprep.subr.mxu0 0.0
        %810 = vmatpush1.msra.mxu0 0.0
        %811 = vmatprep.subr.mxu0 0.0
        %812 = vmatpush1.msra.mxu0 0.0
        %813 = vmatprep.subr.mxu0 0.0
        %814 = vmatpush1.msra.mxu0 0.0
        %815 = vmatprep.mubr.f32.mxu0 0.0
        %816 = vmatmul.mubr.f32.gmra.mrb[0].mxu0 %v727
        %v817 = vpop.f32.mrb[0].mxu0
        %v818 = vadd.f32 0.0, %v817
        %v819 = vpop.f32.mrb[0].mxu0
        %820 = vmatprep.mubr.f32.mxu0 0.0
        %821 = vmatmul.mubr.f32.gmra.mrb[0].mxu0 %v732
        %v822 = vpop.f32.mrb[0].mxu0
        %v823 = vadd.f32 0.0, %v822
        %v824 = vpop.f32.mrb[0].mxu0
        %825 = vdwg.mxu0
        %826 = vst [vmem:[%s301] sm:$0xff] %v818
        %827 = vst [vmem:[%s301 + $0x8] sm:$0xff] %v823
        %s828 = sand.u32 %s160, 1
        %s829 = scalar_lea.sflag [#allocation4], %s828
        %s830 = sand.u32 %s160, 1
        %s831 = smul.addr %s830, 16
        %s832 = scalar_lea.vmem [#allocation8], %s831
        // Predicated region
        $region53: #{tpu_custom_call.1} parent=39 // pred_check
          %p833 = pneg %p170
        $region54: #{tpu_custom_call.1} parent=39 // pred_check_branch
          %835 = sbr.rel (%p833) target = $region56
        $region55: #{tpu_custom_call.1} parent=39 // pred_region
          %s836 = smul.u32 2, %s28
          %s838 = ssub.s32 256, 256
          %839 = vsyncadd %s829, %s838
          %s840 = smul.addr %s27, 4
          %s841 = sadd.s32 %s836, %s840
          %s842 = smul.addr %s841, 128
          %s843 = scalar_lea.hbm %s5, %s842
          %s844 = sshll.u32 %s832, 4
          %s845 = int_to_ptr.vmem [resolvable:$true] %s844
          %850 = dma.vmem_to_hbm [thread:$0]  %s845, 256, %s843, %s829, 128, 128, 8
        $region56: #{tpu_custom_call.1} parent=39 // pred_fallthru
          _
      $region40: #{tpu_custom_call.1} parent=5 // pred_fallthru
        _
      %p851 = scmp.le.s32.totalorder 2, %s18
      // Predicated region
      $region57: #{tpu_custom_call.1} parent=5 // pred_check
        %p852 = pneg %p851
      $region58: #{tpu_custom_call.1} parent=5 // pred_check_branch
        %854 = sbr.rel (%p852) target = $region60
      $region59: #{tpu_custom_call.1} parent=5 // pred_region
        %s855 = ssub.s32 %s18, 2
        // Predicated region
        $region61: #{tpu_custom_call.1} parent=59 // pred_check
          %p856 = pneg %p176
        $region62: #{tpu_custom_call.1} parent=59 // pred_check_branch
          %858 = sbr.rel (%p856) target = $region64
        $region63: #{tpu_custom_call.1} parent=59 // pred_region
          %s859 = sand.u32 %s161, 1
          %s860 = scalar_lea.sflag [#allocation4], %s859
          %s861 = sand.u32 %s161, 1
          %s862 = smul.addr %s861, 16
          %s863 = scalar_lea.vmem [#allocation8], %s862
          %864 = dma.done %s860, 256
        $region64: #{tpu_custom_call.1} parent=59 // pred_fallthru
          _
      $region60: #{tpu_custom_call.1} parent=5 // pred_fallthru
        _
    $region6: #{tpu_custom_call.1} parent=1 // loop_footer
      %s22 = sadd.s32 1, %s18
    $region7: #{tpu_custom_call.1} parent=1 // loop_footer_branch
      %17 = sbr.rel target = $region3
    $region8: #{tpu_custom_call.1} parent=1 // loop_exit
      _
    %865 = vsyncpa [#allocation3], 1
    %s866 = scalar_lea.sflag [#allocation3], 1
    %867 = vsyncpa %s866, 1
    %868 = vsyncpa [#allocation6], 1
    %869 = vsyncpa [#allocation4], 1
    %s870 = scalar_lea.sflag [#allocation4], 1
    %871 = vsyncpa %s870, 1

</llo_original>
